<compile_context>
chip_gen: v7x
topology: tpu7x:2x2x1
jax: 0.10.0
libtpu: 0.0.40
codegen_flags: <defaults>
</compile_context>

<pallas_src>
from functools import partial

import jax
import jax.numpy as jnp
from jax import lax
from jax.experimental import pallas as pl
from jax.experimental.pallas import tpu as pltpu


def _cdiv(a, b):
    return (a + b - 1) // b


def _round_up(x, m):
    return _cdiv(x, m) * m


def critic_kernel(sa_ref, wbd_ref, b0_ref, w1h_ref, b1_ref, w2_ref, b2_ref,
                  out_ref, *, h1):
    # Fused layer 0 + action-half of layer 1: one MXU pass over the
    # block-diagonal weight [[W0^T, 0], [0, W1a^T]].
    cols = jnp.dot(sa_ref[...], wbd_ref[...],
                   preferred_element_type=jnp.float32)        # (tile, h1+h2)

    # layer 0: relu(state @ W0^T + b0)
    h = jnp.maximum(cols[:, :h1] + b0_ref[...], 0.0)          # (tile, h1)

    # layer 1: relu(h @ W1h^T + action @ W1a^T + b1)  (concat avoided by
    # splitting W1 into its x- and action-column blocks)
    z = (jnp.dot(h, w1h_ref[...], preferred_element_type=jnp.float32)
         + cols[:, h1:] + b1_ref[...])
    z = jnp.maximum(z, 0.0)                                   # (tile, h2)

    # layer 2 (output width 1): (1, h2) x (tile, h2)^T on the MXU -> a
    # lane-dense (1, tile) row so the store is a dense vst + contiguous DMA.
    q = lax.dot_general(w2_ref[...], z, (((1,), (1,)), ((), ())),
                        preferred_element_type=jnp.float32)   # (1, tile)
    out_ref[...] = (q + b2_ref[...])[None]                    # (1, 1, tile)


def prepare_params(params):
    """One-time preprocessing: PyTorch nn.Linear layout -> kernel layout.

    Builds the block-diagonal [[W0^T, 0], [0, W1a^T]] weight so layer 0 and the
    action-half of layer 1 fuse into a single MXU pass.  Do this ONCE.
    """
    w0, b0, w1, b1, w2, b2 = params
    w0 = jnp.asarray(w0, jnp.float32)
    w1 = jnp.asarray(w1, jnp.float32)
    w2 = jnp.asarray(w2, jnp.float32)
    h1, state_dim = w0.shape
    h2 = w1.shape[0]
    action_dim = w1.shape[1] - h1
    assert w2.shape[0] == 1, "DDPG critic emits a single Q value"

    w_bd = jnp.zeros((state_dim + action_dim, h1 + h2), jnp.float32)
    w_bd = w_bd.at[:state_dim, :h1].set(w0.T)          # state  -> layer-0 cols
    w_bd = w_bd.at[state_dim:, h1:].set(w1[:, h1:].T)  # action -> layer-1 cols
    return {
        "w_bd":   w_bd,                                        # (sa_dim, h1+h2)
        "b0":     jnp.asarray(b0, jnp.float32).reshape(1, -1),  # (1, h1)
        "w1h_t":  w1[:, :h1].T,                                 # (h1, h2)
        "b1":     jnp.asarray(b1, jnp.float32).reshape(1, -1),  # (1, h2)
        "w2_row": w2.reshape(1, -1),                            # (1, h2)
        "b2":     jnp.asarray(b2, jnp.float32).reshape(1, 1),   # (1, 1)
    }


def _run_tiles(sa_arr, n_tiles, tile, prep):
    """One pallas_call over `n_tiles` full tiles of `tile` rows of sa_arr."""
    h1 = prep["b0"].shape[1]
    h2 = prep["b1"].shape[1]
    sa_dim = prep["w_bd"].shape[0]
    kern = partial(critic_kernel, h1=h1)
    return pl.pallas_call(
        kern,
        out_shape=jax.ShapeDtypeStruct((n_tiles, 1, tile), jnp.float32),
        grid=(n_tiles,),
        in_specs=[
            # per-tile activations: read directly from the (possibly larger)
            # source array; the grid only visits fully in-bounds blocks.
            pl.BlockSpec((tile, sa_dim), lambda i: (i, 0)),
            # parameters: constant index map -> fetched once, VMEM-resident
            pl.BlockSpec((sa_dim, h1 + h2), lambda i: (0, 0)),
            pl.BlockSpec((1, h1), lambda i: (0, 0)),
            pl.BlockSpec((h1, h2), lambda i: (0, 0)),
            pl.BlockSpec((1, h2), lambda i: (0, 0)),
            pl.BlockSpec((1, h2), lambda i: (0, 0)),
            pl.BlockSpec((1, 1), lambda i: (0, 0)),
        ],
        # lane-dense output row per tile
        out_specs=pl.BlockSpec((1, 1, tile), lambda i: (i, 0, 0)),
        compiler_params=pltpu.CompilerParams(
            dimension_semantics=("parallel",),
            vmem_limit_bytes=32 * 1024 * 1024),
    )(sa_arr, prep["w_bd"], prep["b0"], prep["w1h_t"], prep["b1"],
      prep["w2_row"], prep["b2"])


def critic_forward(state_action, prep, *, tile_b=None):
    sa_dim = prep["w_bd"].shape[0]
    assert state_action.shape[1] == sa_dim
    batch = state_action.shape[0]
    sa = jnp.asarray(state_action, jnp.float32)

    # Adaptive batch tile: single round_up(batch, 8) tile for small batches,
    # otherwise ~TARGET rows rounded to 256 so padding waste is at most one
    # partial tile (handled by the remainder call below).
    TARGET = 4096
    if tile_b is None:
        if batch <= TARGET:
            tile_b = _round_up(batch, 8)
        else:
            n = _cdiv(batch, TARGET)
            tile_b = _round_up(_cdiv(batch, n), 256)
    tile_b = max(8, _round_up(tile_b, 8))

    main = (batch // tile_b) * tile_b      # rows covered by full tiles
    rem = batch - main                     # ragged tail (< tile_b rows)

    pieces = []
    if main > 0:
        out_main = _run_tiles(sa, main // tile_b, tile_b, prep)
        pieces.append(out_main.reshape(main, 1))
    if rem > 0:
        # Only the remainder (< one tile) is sliced/padded -> tiny copy.
        rem_tile = _round_up(rem, 8)
        sa_rem = sa[main:]
        if rem_tile != rem:
            sa_rem = jnp.pad(sa_rem, ((0, rem_tile - rem), (0, 0)))
        out_rem = _run_tiles(sa_rem, 1, rem_tile, prep)
        pieces.append(out_rem.reshape(rem_tile, 1)[:rem])
    return pieces[0] if len(pieces) == 1 else jnp.concatenate(pieces, axis=0)


def init_params(key, layers, action_dim, fl_init):
    """Deterministic init matching CriticNet.__init__ shapes/ranges."""
    state_dim, h1, h2, out_dim = layers
    keys = jax.random.split(key, 8)

    def uniform(k, shape, rng):
        return jax.random.uniform(k, shape, jnp.float32, -rng, rng)

    # layer 0: Linear(state_dim, h1); fan-in init
    w0 = uniform(keys[0], (h1, state_dim), 1.0 / jnp.sqrt(jnp.float32(state_dim)))
    b0 = uniform(keys[1], (h1,), 1.0 / jnp.sqrt(jnp.float32(state_dim)))
    # layer 1: Linear(h1 + action_dim, h2); fan-in init
    fan1 = h1 + action_dim
    w1 = uniform(keys[2], (h2, fan1), 1.0 / jnp.sqrt(jnp.float32(fan1)))
    b1 = uniform(keys[3], (h2,), 1.0 / jnp.sqrt(jnp.float32(fan1)))
    # final layer: uniform(-fl_init, fl_init) on weight AND bias
    w2 = uniform(keys[4], (out_dim, h2), fl_init)
    b2 = uniform(keys[5], (out_dim,), fl_init)
    return (w0, b0, w1, b1, w2, b2)


def reference_forward(state_action, params, state_dim):
    """Pure-JAX reference of the PyTorch forward for correctness checks."""
    w0, b0, w1, b1, w2, b2 = params
    state = state_action[:, :state_dim]
    action = state_action[:, state_dim:]
    x = jax.nn.relu(state @ w0.T + b0)
    x = jnp.concatenate([x, action], axis=1)
    x = jax.nn.relu(x @ w1.T + b1)
    return x @ w2.T + b2


if __name__ == "__main__":
    # layers = [state_dim, h1, h2, 1], activations = ['relu', 'relu', 'linear']
    layers = [16, 64, 32, 1]
    action_dim = 8
    fl_init = 3e-3
    state_dim = layers[0]

    key = jax.random.PRNGKey(0)
    k_params, k_in0, k_in1 = jax.random.split(key, 3)
    params = init_params(k_params, layers, action_dim, fl_init)
    prep = prepare_params(params)   # one-time weight preprocessing

    fwd = jax.jit(critic_forward, static_argnames=("tile_b",))

    # --- small-batch check (single full tile, default tiling) ---
    batch = 8
    sa_small = jax.random.normal(k_in0, (batch, state_dim + action_dim), jnp.float32)
    out = jax.block_until_ready(fwd(sa_small, prep))
    ref = reference_forward(sa_small, params, state_dim)
    assert out.shape == (batch, 1), out.shape
    assert jnp.allclose(out, ref, atol=1e-4, rtol=1e-4)

    # --- multi-tile check: 2 full tiles read in place + padded remainder ---
    batch2 = 300
    sa_big = jax.random.normal(k_in1, (batch2, state_dim + action_dim), jnp.float32)
    out2 = jax.block_until_ready(fwd(sa_big, prep, tile_b=128))
    ref2 = reference_forward(sa_big, params, state_dim)
    assert out2.shape == (batch2, 1), out2.shape
    assert jnp.allclose(out2, ref2, atol=1e-4, rtol=1e-4)

    # --- default adaptive tiling on a non-multiple-of-8 batch (remainder path) ---
    out3 = jax.block_until_ready(fwd(sa_big, prep))
    assert out3.shape == (batch2, 1), out3.shape
    assert jnp.allclose(out3, ref2, atol=1e-4, rtol=1e-4)

    print("KERNEL_OK")
</pallas_src>

<mosaic_0001>
module attributes {stable_mosaic.version = 11 : i64} {
  func.func @critic_kernel(%arg0: i32, %arg1: memref<8x24xf32, #tpu.memory_space<vmem>>, %arg2: memref<24x96xf32, #tpu.memory_space<vmem>>, %arg3: memref<1x64xf32, #tpu.memory_space<vmem>>, %arg4: memref<64x32xf32, #tpu.memory_space<vmem>>, %arg5: memref<1x32xf32, #tpu.memory_space<vmem>>, %arg6: memref<1x32xf32, #tpu.memory_space<vmem>>, %arg7: memref<1x1xf32, #tpu.memory_space<vmem>>, %arg8: memref<1x1x8xf32, #tpu.memory_space<vmem>>) attributes {dimension_semantics = [#tpu.dimension_semantics<parallel>], iteration_bounds = array<i64: 1>, scalar_prefetch = 0 : i64, scratch_operands = 0 : i64, tpu.core_type = #tpu.core_type<tc>, window_params = [{transform_indices = @transform_0, window_bounds = array<i64: 8, 24>}, {pipeline_mode = #tpu.pipeline_mode<synchronous>, transform_indices = @transform_1, window_bounds = array<i64: 24, 96>}, {pipeline_mode = #tpu.pipeline_mode<synchronous>, transform_indices = @transform_2, window_bounds = array<i64: 1, 64>}, {pipeline_mode = #tpu.pipeline_mode<synchronous>, transform_indices = @transform_3, window_bounds = array<i64: 64, 32>}, {pipeline_mode = #tpu.pipeline_mode<synchronous>, transform_indices = @transform_4, window_bounds = array<i64: 1, 32>}, {pipeline_mode = #tpu.pipeline_mode<synchronous>, transform_indices = @transform_5, window_bounds = array<i64: 1, 32>}, {pipeline_mode = #tpu.pipeline_mode<synchronous>, transform_indices = @transform_6, window_bounds = array<i64: 1, 1>}, {transform_indices = @transform_7, window_bounds = array<i64: 1, 1, 8>}]} {
    %c0 = arith.constant 0 : index
    %c0_0 = arith.constant 0 : index
    %0 = vector.load %arg1[%c0, %c0_0] : memref<8x24xf32, #tpu.memory_space<vmem>>, vector<8x24xf32>
    %c0_1 = arith.constant 0 : index
    %c0_2 = arith.constant 0 : index
    %1 = vector.load %arg2[%c0_1, %c0_2] : memref<24x96xf32, #tpu.memory_space<vmem>>, vector<24x96xf32>
    %cst = arith.constant dense<0.000000e+00> : vector<8x96xf32>
    %2 = tpu.matmul %0, %1, %cst {dimension_numbers = #tpu.dot_dimension_numbers<[1], [0], [0], [1], [0, 0, 1, 1], [], []>} : vector<8x24xf32>, vector<24x96xf32>, vector<8x96xf32> -> vector<8x96xf32>
    %3 = vector.extract_strided_slice %2 {offsets = [0, 0], sizes = [8, 64], strides = [1, 1]} : vector<8x96xf32> to vector<8x64xf32>
    %c0_3 = arith.constant 0 : index
    %c0_4 = arith.constant 0 : index
    %4 = vector.load %arg3[%c0_3, %c0_4] : memref<1x64xf32, #tpu.memory_space<vmem>>, vector<1x64xf32>
    %5 = vector.broadcast %4 : vector<1x64xf32> to vector<8x64xf32>
    %6 = arith.addf %3, %5 : vector<8x64xf32>
    %cst_5 = arith.constant 0.000000e+00 : f32
    %7 = vector.broadcast %cst_5 : f32 to vector<8x64xf32>
    %8 = arith.maximumf %6, %7 : vector<8x64xf32>
    %c0_6 = arith.constant 0 : index
    %c0_7 = arith.constant 0 : index
    %9 = vector.load %arg4[%c0_6, %c0_7] : memref<64x32xf32, #tpu.memory_space<vmem>>, vector<64x32xf32>
    %cst_8 = arith.constant dense<0.000000e+00> : vector<8x32xf32>
    %10 = tpu.matmul %8, %9, %cst_8 {dimension_numbers = #tpu.dot_dimension_numbers<[1], [0], [0], [1], [0, 0, 1, 1], [], []>} : vector<8x64xf32>, vector<64x32xf32>, vector<8x32xf32> -> vector<8x32xf32>
    %11 = vector.extract_strided_slice %2 {offsets = [0, 64], sizes = [8, 32], strides = [1, 1]} : vector<8x96xf32> to vector<8x32xf32>
    %12 = arith.addf %10, %11 : vector<8x32xf32>
    %c0_9 = arith.constant 0 : index
    %c0_10 = arith.constant 0 : index
    %13 = vector.load %arg5[%c0_9, %c0_10] : memref<1x32xf32, #tpu.memory_space<vmem>>, vector<1x32xf32>
    %14 = vector.broadcast %13 : vector<1x32xf32> to vector<8x32xf32>
    %15 = arith.addf %12, %14 : vector<8x32xf32>
    %cst_11 = arith.constant 0.000000e+00 : f32
    %16 = vector.broadcast %cst_11 : f32 to vector<8x32xf32>
    %17 = arith.maximumf %15, %16 : vector<8x32xf32>
    %c0_12 = arith.constant 0 : index
    %c0_13 = arith.constant 0 : index
    %18 = vector.load %arg6[%c0_12, %c0_13] : memref<1x32xf32, #tpu.memory_space<vmem>>, vector<1x32xf32>
    %cst_14 = arith.constant dense<0.000000e+00> : vector<1x8xf32>
    %19 = tpu.matmul %18, %17, %cst_14 {dimension_numbers = #tpu.dot_dimension_numbers<[1], [1], [0], [0], [0, 0, 1, 0], [], []>} : vector<1x32xf32>, vector<8x32xf32>, vector<1x8xf32> -> vector<1x8xf32>
    %c0_15 = arith.constant 0 : index
    %c0_16 = arith.constant 0 : index
    %20 = vector.load %arg7[%c0_15, %c0_16] : memref<1x1xf32, #tpu.memory_space<vmem>>, vector<1x1xf32>
    %21 = vector.broadcast %20 : vector<1x1xf32> to vector<1x8xf32>
    %22 = arith.addf %19, %21 : vector<1x8xf32>
    %23 = vector.shape_cast %22 : vector<1x8xf32> to vector<1x1x8xf32>
    %c0_17 = arith.constant 0 : index
    %c0_18 = arith.constant 0 : index
    %c0_19 = arith.constant 0 : index
    %24 = vector.load %arg8[%c0_17, %c0_18, %c0_19] : memref<1x1x8xf32, #tpu.memory_space<vmem>>, vector<1x1x8xf32>
    tpu.vector_store %arg8[%c0_17, %c0_18, %c0_19], %23 {strides = array<i32>} : memref<1x1x8xf32, #tpu.memory_space<vmem>>, vector<1x1x8xf32>,
    return
  }
  func.func @transform_0(%arg0: i32) -> (i32, i32) {
    %c0_i32 = arith.constant 0 : i32
    %c0_i32_0 = arith.constant 0 : i32
    return %arg0, %c0_i32 : i32, i32
  }
  func.func @transform_1(%arg0: i32) -> (i32, i32) {
    %c0_i32 = arith.constant 0 : i32
    %c0_i32_0 = arith.constant 0 : i32
    %c0_i32_1 = arith.constant 0 : i32
    return %c0_i32, %c0_i32_0 : i32, i32
  }
  func.func @transform_2(%arg0: i32) -> (i32, i32) {
    %c0_i32 = arith.constant 0 : i32
    %c0_i32_0 = arith.constant 0 : i32
    %c0_i32_1 = arith.constant 0 : i32
    return %c0_i32, %c0_i32_0 : i32, i32
  }
  func.func @transform_3(%arg0: i32) -> (i32, i32) {
    %c0_i32 = arith.constant 0 : i32
    %c0_i32_0 = arith.constant 0 : i32
    %c0_i32_1 = arith.constant 0 : i32
    return %c0_i32, %c0_i32_0 : i32, i32
  }
  func.func @transform_4(%arg0: i32) -> (i32, i32) {
    %c0_i32 = arith.constant 0 : i32
    %c0_i32_0 = arith.constant 0 : i32
    %c0_i32_1 = arith.constant 0 : i32
    return %c0_i32, %c0_i32_0 : i32, i32
  }
  func.func @transform_5(%arg0: i32) -> (i32, i32) {
    %c0_i32 = arith.constant 0 : i32
    %c0_i32_0 = arith.constant 0 : i32
    %c0_i32_1 = arith.constant 0 : i32
    return %c0_i32, %c0_i32_0 : i32, i32
  }
  func.func @transform_6(%arg0: i32) -> (i32, i32) {
    %c0_i32 = arith.constant 0 : i32
    %c0_i32_0 = arith.constant 0 : i32
    %c0_i32_1 = arith.constant 0 : i32
    return %c0_i32, %c0_i32_0 : i32, i32
  }
  func.func @transform_7(%arg0: i32) -> (i32, i32, i32) {
    %c0_i32 = arith.constant 0 : i32
    %c0_i32_0 = arith.constant 0 : i32
    %c0_i32_1 = arith.constant 0 : i32
    return %arg0, %c0_i32, %c0_i32_0 : i32, i32, i32
  }
}

</mosaic_0001>

<llo_original>
// kernel: critic_forward.1
$region0: #{critic_forward.1}
  #allocation0 [shape = 'u32[]', space=smem, size = 0x4, offset = 0x4, fixed_abs, tag = 'smem constant byte address 0x4 - core index']
  #allocation1 [shape = 'u32[144,128]{1,0:T(1,128)}', space=vmem, size = 0x12000, scoped, tag = 'internal scratch']
  #allocation2 [shape = 'f32[1,1]{1,0:T(1,128)S(1)}', space=vmem, size = 0x200, scoped, tag = 'scoped memory for critic_forward.1']
  %s0 = inlined_call_operand.vmem [shape: f32[8,24], index: 0, kind: input, shape index: {}]
  %s1 = inlined_call_operand.vmem [shape: f32[24,96], index: 1, kind: input, shape index: {}]
  %s2 = inlined_call_operand.vmem [shape: f32[1,64], index: 2, kind: input, shape index: {}]
  %s3 = inlined_call_operand.vmem [shape: f32[64,32], index: 3, kind: input, shape index: {}]
  %s4 = inlined_call_operand.vmem [shape: f32[1,32], index: 4, kind: input, shape index: {}]
  %s5 = inlined_call_operand.vmem [shape: f32[1,32], index: 5, kind: input, shape index: {}]
  %s6 = inlined_call_operand.<no memory space> [shape: f32[1,1], index: 6, kind: input, shape index: {}]
  %s7 = inlined_call_operand.hbm [shape: f32[1,1,8], index: 7, kind: output, shape index: {}]
  %s8 = sld [smem:[#allocation0]]
  $region38: #{critic_forward.1} parent=0
    _
  %s10 = ssub.s32 1, %s8
  %s11 = scalar_select 0, %s10, %s8
  %v12 = vstv %s6
  %13 = vst [vmem:[#allocation2] sm:$0x1] %v12
  $region1: #{critic_forward.1} parent=0
    #allocation3 [shape = 'u8[512]{0}', space=vmem, size = 0x400, scoped, tag = 'output window, operand 0, single buffered']
    #allocation4 [shape = 's32[1]{0}', space=sflag, size = 0x4, scoped, tag = 'scoped memory for critic_forward.1']
    %14 = vsyncpa [#allocation4], 0
    // Predicated region
    $region2: #{critic_forward.1} parent=1 // pred_check
      _
    $region3: #{critic_forward.1} parent=1 // pred_check_branch
      %16 = sbr.rel (0) target = $region5
    $region4: #{critic_forward.1} parent=1 // pred_region
      _
    $region5: #{critic_forward.1} parent=1 // pred_fallthru
      _
    // Predicated region
    $region6: #{critic_forward.1} parent=1 // pred_check
      _
    $region7: #{critic_forward.1} parent=1 // pred_check_branch
      %18 = sbr.rel (0) target = $region9
    $region8: #{critic_forward.1} parent=1 // pred_region
      _
    $region9: #{critic_forward.1} parent=1 // pred_fallthru
      _
    // Predicated region
    $region10: #{critic_forward.1} parent=1 // pred_check
      _
    $region11: #{critic_forward.1} parent=1 // pred_check_branch
      %20 = sbr.rel (0) target = $region13
    $region12: #{critic_forward.1} parent=1 // pred_region
      _
    $region13: #{critic_forward.1} parent=1 // pred_fallthru
      _
    // Predicated region
    $region14: #{critic_forward.1} parent=1 // pred_check
      _
    $region15: #{critic_forward.1} parent=1 // pred_check_branch
      %22 = sbr.rel (0) target = $region17
    $region16: #{critic_forward.1} parent=1 // pred_region
      _
    $region17: #{critic_forward.1} parent=1 // pred_fallthru
      _
    // Predicated region
    $region18: #{critic_forward.1} parent=1 // pred_check
      _
    $region19: #{critic_forward.1} parent=1 // pred_check_branch
      %24 = sbr.rel (0) target = $region21
    $region20: #{critic_forward.1} parent=1 // pred_region
      _
    $region21: #{critic_forward.1} parent=1 // pred_fallthru
      _
    // Predicated region
    $region22: #{critic_forward.1} parent=1 // pred_check
      _
    $region23: #{critic_forward.1} parent=1 // pred_check_branch
      %26 = sbr.rel (0) target = $region25
    $region24: #{critic_forward.1} parent=1 // pred_region
      _
    $region25: #{critic_forward.1} parent=1 // pred_fallthru
      _
    // Predicated region
    $region26: #{critic_forward.1} parent=1 // pred_check
      _
    $region27: #{critic_forward.1} parent=1 // pred_check_branch
      %28 = sbr.rel (0) target = $region29
    $region28: #{critic_forward.1} parent=1 // pred_region
      _
    $region29: #{critic_forward.1} parent=1 // pred_fallthru
      _
    %v29 = vld [vmem:[%s0] sm:$0xff]
    %v30 = vld [vmem:[%s1] sm:$0xff]
    %v31 = vld [vmem:[%s1 + $0x8] sm:$0xff]
    %v32 = vld [vmem:[%s1 + $0x10] sm:$0xff]
    %vm33 = vcmask 195584
    %v35 = vsel %vm33, %v29, 0
    %37 = vmatprep.subr.mxu0 0.0
    %38 = vmatpush1.msra.mxu0 %v30
    %39 = vmatprep.subr.mxu0 0.0
    %40 = vmatpush1.msra.mxu0 %v31
    %41 = vmatprep.subr.mxu0 0.0
    %42 = vmatpush1.msra.mxu0 %v32
    %43 = vmatprep.subr.mxu0 0.0
    %44 = vmatpush1.msra.mxu0 0.0
    %45 = vmatprep.subr.mxu0 0.0
    %46 = vmatpush1.msra.mxu0 0.0
    %47 = vmatprep.subr.mxu0 0.0
    %48 = vmatpush1.msra.mxu0 0.0
    %49 = vmatprep.subr.mxu0 0.0
    %50 = vmatpush1.msra.mxu0 0.0
    %51 = vmatprep.subr.mxu0 0.0
    %52 = vmatpush1.msra.mxu0 0.0
    %53 = vmatprep.subr.mxu0 0.0
    %54 = vmatpush1.msra.mxu0 0.0
    %55 = vmatprep.subr.mxu0 0.0
    %56 = vmatpush1.msra.mxu0 0.0
    %57 = vmatprep.subr.mxu0 0.0
    %58 = vmatpush1.msra.mxu0 0.0
    %59 = vmatprep.subr.mxu0 0.0
    %60 = vmatpush1.msra.mxu0 0.0
    %61 = vmatprep.subr.mxu0 0.0
    %62 = vmatpush1.msra.mxu0 0.0
    %63 = vmatprep.subr.mxu0 0.0
    %64 = vmatpush1.msra.mxu0 0.0
    %65 = vmatprep.subr.mxu0 0.0
    %66 = vmatpush1.msra.mxu0 0.0
    %67 = vmatprep.subr.mxu0 0.0
    %68 = vmatpush1.msra.mxu0 0.0
    %69 = vmatprep.subr.mxu0 0.0
    %70 = vmatpush1.msra.mxu0 0.0
    %71 = vmatprep.subr.mxu0 0.0
    %72 = vmatpush1.msra.mxu0 0.0
    %73 = vmatprep.subr.mxu0 0.0
    %74 = vmatpush1.msra.mxu0 0.0
    %75 = vmatprep.subr.mxu0 0.0
    %76 = vmatpush1.msra.mxu0 0.0
    %77 = vmatprep.subr.mxu0 0.0
    %78 = vmatpush1.msra.mxu0 0.0
    %79 = vmatprep.subr.mxu0 0.0
    %80 = vmatpush1.msra.mxu0 0.0
    %81 = vmatprep.subr.mxu0 0.0
    %82 = vmatpush1.msra.mxu0 0.0
    %83 = vmatprep.subr.mxu0 0.0
    %84 = vmatpush1.msra.mxu0 0.0
    %85 = vmatprep.subr.mxu0 0.0
    %86 = vmatpush1.msra.mxu0 0.0
    %87 = vmatprep.subr.mxu0 0.0
    %88 = vmatpush1.msra.mxu0 0.0
    %89 = vmatprep.subr.mxu0 0.0
    %90 = vmatpush1.msra.mxu0 0.0
    %91 = vmatprep.subr.mxu0 0.0
    %92 = vmatpush1.msra.mxu0 0.0
    %93 = vmatprep.subr.mxu0 0.0
    %94 = vmatpush1.msra.mxu0 0.0
    %95 = vmatprep.subr.mxu0 0.0
    %96 = vmatpush1.msra.mxu0 0.0
    %97 = vmatprep.subr.mxu0 0.0
    %98 = vmatpush1.msra.mxu0 0.0
    %99 = vmatprep.subr.mxu0 0.0
    %100 = vmatpush1.msra.mxu0 0.0
    %101 = vmatprep.mubr.f32.mxu0 0.0
    %102 = vmatmul.mubr.f32.gmra.mrb[0].mxu0 %v35
    %v103 = vpop.f32.mrb[0].mxu0
    %v104 = vadd.f32 0.0, %v103
    %v105 = vpop.f32.mrb[0].mxu0
    %106 = vdwg.mxu0
    %v107 = vld [vmem:[%s2] sm:$0x1]
    %v109 = vlaneseq
    %v110 = vshrl.u32 %v109, 7
    %v111 = vsub.s32 0, %v110
    %v112 = vrot.slane %v107, %v111
    %v114 = vadd.f32 %v104, %v112
    %v115 = vmax.f32 %v114, 0.0
    %v116 = vld [vmem:[%s3] sm:$0xff]
    %v117 = vld [vmem:[%s3 + $0x8] sm:$0xff]
    %v118 = vld [vmem:[%s3 + $0x10] sm:$0xff]
    %v119 = vld [vmem:[%s3 + $0x18] sm:$0xff]
    %v120 = vld [vmem:[%s3 + $0x20] sm:$0xff]
    %v121 = vld [vmem:[%s3 + $0x28] sm:$0xff]
    %v122 = vld [vmem:[%s3 + $0x30] sm:$0xff]
    %v123 = vld [vmem:[%s3 + $0x38] sm:$0xff]
    %125 = vrot.lane.b32.xlu0 %v104, 64
    %v126 = vpop.permute.xlu0 %125
    %vm128 = vcmask 523264
    %v130 = vsel %vm128, %v115, 0
    %132 = vmatprep.subr.mxu0 0.0
    %133 = vmatpush1.msra.mxu0 %v116
    %134 = vmatprep.subr.mxu0 0.0
    %135 = vmatpush1.msra.mxu0 %v117
    %136 = vmatprep.subr.mxu0 0.0
    %137 = vmatpush1.msra.mxu0 %v118
    %138 = vmatprep.subr.mxu0 0.0
    %139 = vmatpush1.msra.mxu0 %v119
    %140 = vmatprep.subr.mxu0 0.0
    %141 = vmatpush1.msra.mxu0 %v120
    %142 = vmatprep.subr.mxu0 0.0
    %143 = vmatpush1.msra.mxu0 %v121
    %144 = vmatprep.subr.mxu0 0.0
    %145 = vmatpush1.msra.mxu0 %v122
    %146 = vmatprep.subr.mxu0 0.0
    %147 = vmatpush1.msra.mxu0 %v123
    %148 = vmatprep.subr.mxu0 0.0
    %149 = vmatpush1.msra.mxu0 0.0
    %150 = vmatprep.subr.mxu0 0.0
    %151 = vmatpush1.msra.mxu0 0.0
    %152 = vmatprep.subr.mxu0 0.0
    %153 = vmatpush1.msra.mxu0 0.0
    %154 = vmatprep.subr.mxu0 0.0
    %155 = vmatpush1.msra.mxu0 0.0
    %156 = vmatprep.subr.mxu0 0.0
    %157 = vmatpush1.msra.mxu0 0.0
    %158 = vmatprep.subr.mxu0 0.0
    %159 = vmatpush1.msra.mxu0 0.0
    %160 = vmatprep.subr.mxu0 0.0
    %161 = vmatpush1.msra.mxu0 0.0
    %162 = vmatprep.subr.mxu0 0.0
    %163 = vmatpush1.msra.mxu0 0.0
    %164 = vmatprep.subr.mxu0 0.0
    %165 = vmatpush1.msra.mxu0 0.0
    %166 = vmatprep.subr.mxu0 0.0
    %167 = vmatpush1.msra.mxu0 0.0
    %168 = vmatprep.subr.mxu0 0.0
    %169 = vmatpush1.msra.mxu0 0.0
    %170 = vmatprep.subr.mxu0 0.0
    %171 = vmatpush1.msra.mxu0 0.0
    %172 = vmatprep.subr.mxu0 0.0
    %173 = vmatpush1.msra.mxu0 0.0
    %174 = vmatprep.subr.mxu0 0.0
    %175 = vmatpush1.msra.mxu0 0.0
    %176 = vmatprep.subr.mxu0 0.0
    %177 = vmatpush1.msra.mxu0 0.0
    %178 = vmatprep.subr.mxu0 0.0
    %179 = vmatpush1.msra.mxu0 0.0
    %180 = vmatprep.subr.mxu0 0.0
    %181 = vmatpush1.msra.mxu0 0.0
    %182 = vmatprep.subr.mxu0 0.0
    %183 = vmatpush1.msra.mxu0 0.0
    %184 = vmatprep.subr.mxu0 0.0
    %185 = vmatpush1.msra.mxu0 0.0
    %186 = vmatprep.subr.mxu0 0.0
    %187 = vmatpush1.msra.mxu0 0.0
    %188 = vmatprep.subr.mxu0 0.0
    %189 = vmatpush1.msra.mxu0 0.0
    %190 = vmatprep.subr.mxu0 0.0
    %191 = vmatpush1.msra.mxu0 0.0
    %192 = vmatprep.subr.mxu0 0.0
    %193 = vmatpush1.msra.mxu0 0.0
    %194 = vmatprep.subr.mxu0 0.0
    %195 = vmatpush1.msra.mxu0 0.0
    %196 = vmatprep.mubr.f32.mxu0 0.0
    %197 = vmatmul.mubr.f32.gmra.mrb[0].mxu0 %v130
    %v198 = vpop.f32.mrb[0].mxu0
    %v199 = vadd.f32 %v126, %v198
    %v200 = vpop.f32.mrb[0].mxu0
    %201 = vdwg.mxu0
    %v202 = vld [vmem:[%s4] sm:$0x1]
    %v204 = vlaneseq
    %v205 = vshrl.u32 %v204, 7
    %v206 = vsub.s32 0, %v205
    %v207 = vrot.slane %v202, %v206
    %v209 = vadd.f32 %v199, %v207
    %v210 = vmax.f32 %v209, 0.0
    %v211 = vld [vmem:[%s5] sm:$0x1]
    %v212 = vld [vmem:[#allocation2] sm:$0x1]
    %214 = vset.pattern.permute.xlu0 0
    %215 = vperm.xlu0 %214, %v212
    %v216 = vpop.permute.xlu0 %215
    %v218 = vlaneseq
    %v219 = vshrl.u32 %v218, 7
    %v220 = vsub.s32 0, %v219
    %v221 = vrot.slane %v216, %v220
    %vm222 = vcmask 261120
    %v224 = vsel %vm222, %v211, 0
    %v227 = vsel %vm222, %v210, 0
    %229 = vmatprep.subr.mxu0 0.0
    %230 = vmatpush1.xpose.msra.mxu0 %v227
    %231 = vmatprep.subr.mxu0 0.0
    %232 = vmatpush1.xpose.msra.mxu0 0.0
    %233 = vmatprep.subr.mxu0 0.0
    %234 = vmatpush1.xpose.msra.mxu0 0.0
    %235 = vmatprep.subr.mxu0 0.0
    %236 = vmatpush1.xpose.msra.mxu0 0.0
    %237 = vmatprep.subr.mxu0 0.0
    %238 = vmatpush1.xpose.msra.mxu0 0.0
    %239 = vmatprep.subr.mxu0 0.0
    %240 = vmatpush1.xpose.msra.mxu0 0.0
    %241 = vmatprep.subr.mxu0 0.0
    %242 = vmatpush1.xpose.msra.mxu0 0.0
    %243 = vmatprep.subr.mxu0 0.0
    %244 = vmatpush1.xpose.msra.mxu0 0.0
    %245 = vmatprep.subr.mxu0 0.0
    %246 = vmatpush1.xpose.msra.mxu0 0.0
    %247 = vmatprep.subr.mxu0 0.0
    %248 = vmatpush1.xpose.msra.mxu0 0.0
    %249 = vmatprep.subr.mxu0 0.0
    %250 = vmatpush1.xpose.msra.mxu0 0.0
    %251 = vmatprep.subr.mxu0 0.0
    %252 = vmatpush1.xpose.msra.mxu0 0.0
    %253 = vmatprep.subr.mxu0 0.0
    %254 = vmatpush1.xpose.msra.mxu0 0.0
    %255 = vmatprep.subr.mxu0 0.0
    %256 = vmatpush1.xpose.msra.mxu0 0.0
    %257 = vmatprep.subr.mxu0 0.0
    %258 = vmatpush1.xpose.msra.mxu0 0.0
    %259 = vmatprep.subr.mxu0 0.0
    %260 = vmatpush1.xpose.msra.mxu0 0.0
    %261 = vmatprep.subr.mxu0 0.0
    %262 = vmatpush1.xpose.msra.mxu0 0.0
    %263 = vmatprep.subr.mxu0 0.0
    %264 = vmatpush1.xpose.msra.mxu0 0.0
    %265 = vmatprep.subr.mxu0 0.0
    %266 = vmatpush1.xpose.msra.mxu0 0.0
    %267 = vmatprep.subr.mxu0 0.0
    %268 = vmatpush1.xpose.msra.mxu0 0.0
    %269 = vmatprep.subr.mxu0 0.0
    %270 = vmatpush1.xpose.msra.mxu0 0.0
    %271 = vmatprep.subr.mxu0 0.0
    %272 = vmatpush1.xpose.msra.mxu0 0.0
    %273 = vmatprep.subr.mxu0 0.0
    %274 = vmatpush1.xpose.msra.mxu0 0.0
    %275 = vmatprep.subr.mxu0 0.0
    %276 = vmatpush1.xpose.msra.mxu0 0.0
    %277 = vmatprep.subr.mxu0 0.0
    %278 = vmatpush1.xpose.msra.mxu0 0.0
    %279 = vmatprep.subr.mxu0 0.0
    %280 = vmatpush1.xpose.msra.mxu0 0.0
    %281 = vmatprep.subr.mxu0 0.0
    %282 = vmatpush1.xpose.msra.mxu0 0.0
    %283 = vmatprep.subr.mxu0 0.0
    %284 = vmatpush1.xpose.msra.mxu0 0.0
    %285 = vmatprep.subr.mxu0 0.0
    %286 = vmatpush1.xpose.msra.mxu0 0.0
    %287 = vmatprep.subr.mxu0 0.0
    %288 = vmatpush1.xpose.msra.mxu0 0.0
    %289 = vmatprep.subr.mxu0 0.0
    %290 = vmatpush1.xpose.msra.mxu0 0.0
    %291 = vmatprep.subr.mxu0 0.0
    %292 = vmatpush1.xpose.msra.mxu0 0.0
    %293 = vmatprep.mubr.f32.mxu0 0.0
    %294 = vmatmul.mubr.f32.gmra.mrb[0].mxu0 %v224
    %v295 = vpop.f32.mrb[0].mxu0
    %v296 = vadd.f32 %v221, %v295
    %v297 = vpop.f32.mrb[0].mxu0
    %298 = vdwg.mxu0
    %vm299 = vcmask 57344
    %300 = vst.msk [vmem:[#allocation3] sm:$0x1] %vm299, %v296
    // Predicated region
    $region30: #{critic_forward.1} parent=1 // pred_check
      _
    $region31: #{critic_forward.1} parent=1 // pred_check_branch
      %302 = sbr.rel (0) target = $region33
    $region32: #{critic_forward.1} parent=1 // pred_region
      %s304 = ssub.s32 16, 16
      %305 = vsyncadd [#allocation4], %s304
      %s307 = sshll.u32 [#allocation3], 4
      %s308 = int_to_ptr.vmem [resolvable:$true] %s307
      %310 = dma.vmem_to_hbm [thread:$0]  %s308, 16, %s7, [#allocation4]
    $region33: #{critic_forward.1} parent=1 // pred_fallthru
      _
    // Predicated region
    $region34: #{critic_forward.1} parent=1 // pred_check
      _
    $region35: #{critic_forward.1} parent=1 // pred_check_branch
      %312 = sbr.rel (0) target = $region37
    $region36: #{critic_forward.1} parent=1 // pred_region
      %313 = dma.done [#allocation4], 16
    $region37: #{critic_forward.1} parent=1 // pred_fallthru
      _
    %314 = vsyncpa [#allocation4], 1

</llo_original>
